<compile_context>
chip_gen: v7x
topology: tpu7x:2x2x1
jax: 0.10.0
libtpu: 0.0.40
codegen_flags: <defaults>
</compile_context>

<pallas_src>
import jax
import jax.numpy as jnp
from jax.experimental import pallas as pl
from jax.experimental.pallas import tpu as pltpu


def _arctan_kernel(x_ref, o_ref):
    # Compute in f32 regardless of the storage dtype.
    x = x_ref[...].astype(jnp.float32)
    a = jnp.abs(x)

    tan3pio8 = 2.414213562373095   # tan(3*pi/8)
    tanpio8 = 0.4142135623730950   # tan(pi/8)
    pio2 = 1.5707963267948966
    pio4 = 0.7853981633974483

    big = a > tan3pio8
    mid = a > tanpio8              # nested where below gives `big` priority

    # Single-divide range reduction, w = n / d:
    #   a > tan(3pi/8): arctan(a) = pi/2 + arctan(-1/a)
    #   a > tan(pi/8) : arctan(a) = pi/4 + arctan((a-1)/(a+1))
    #   else          : arctan(a) = arctan(a)
    # `a` is clamped in the big branch so x = +/-inf still returns +/-pi/2.
    n = jnp.where(big, -1.0, jnp.where(mid, a - 1.0, a))
    d = jnp.where(big, jnp.minimum(a, 1e30), jnp.where(mid, a + 1.0, 1.0))
    offset = jnp.where(big, pio2, jnp.where(mid, pio4, 0.0))

    # EUP approximate reciprocal + one Newton step (d >= 1 in every branch,
    # so one refinement gives ~1e-7 relative accuracy).
    r0 = pl.reciprocal(d, approx=True)
    rcp = r0 * (2.0 - d * r0)
    w = n * rcp

    # Odd degree-7 minimax polynomial (Cephes atanf), ~2 ulp in f32.
    z = w * w
    p = (((8.05374449538e-2 * z - 1.38776856032e-1) * z
          + 1.99777106478e-1) * z - 3.33329491539e-1)
    r = offset + w * (1.0 + z * p)          # arctan(|x|), always >= 0

    # Transfer the sign of x with bit ops (arctan is odd; preserves -0.0).
    sign = pltpu.bitcast(x, jnp.uint32) & jnp.uint32(0x80000000)
    r = pltpu.bitcast(pltpu.bitcast(r, jnp.uint32) | sign, jnp.float32)

    o_ref[...] = r.astype(o_ref.dtype)


def arctan_pallas(x, *, target_block_bytes=2 * 1024 * 1024, min_grid_steps=4):
    """torch.arctan(x) equivalent, computed in a Pallas TPU kernel."""
    orig_shape = x.shape
    dtype = x.dtype
    total = x.size
    if total == 0:
        return x

    itemsize = jnp.dtype(dtype).itemsize
    # Sublane minimum: 8 for 32-bit, 16 for bf16/f16, 32 for int8/fp8.
    sub_min = max(8, 32 // itemsize)

    # Lane width: widest multiple of 128 that divides `total` and leaves at
    # least sub_min rows (lane-dense unmasked stores, no padding needed).
    lanes = None
    for lw in (1024, 512, 256, 128):
        if total % lw == 0 and total // lw >= sub_min:
            lanes = lw
            break
    if lanes is None:
        for lw in (1024, 512, 256, 128):
            if total % lw == 0:
                lanes = lw
                break

    x_flat = jnp.ravel(x)
    needs_pad = lanes is None
    if needs_pad:
        # total not a multiple of 128: pad the flat vector (< 128 elements).
        # Only case that incurs extra pad / slice-back HBM copies.
        lanes = 128
        padded_total = pl.cdiv(total, lanes) * lanes
        x_flat = jnp.pad(x_flat, (0, padded_total - total))
    else:
        padded_total = total

    rows = padded_total // lanes
    x2d = x_flat.reshape(rows, lanes)

    if rows < sub_min:
        # Tiny input: one block spanning the whole (small) array.
        row_tile = rows
    else:
        # Largest multiple of sub_min with ~target_block_bytes per block
        # (in+out double-buffered fits every generation's scoped VMEM), but
        # keep >= min_grid_steps grid steps when possible so v7x can shard
        # the parallel grid axis across its two TensorCores.
        max_rows = max(sub_min,
                       (target_block_bytes // (lanes * itemsize))
                       // sub_min * sub_min)
        rows_per_step = pl.cdiv(pl.cdiv(rows, min_grid_steps), sub_min) * sub_min
        row_tile = max(sub_min, min(max_rows, rows_per_step))

    grid = (pl.cdiv(rows, row_tile),)   # partial last block masked by Pallas
    out2d = pl.pallas_call(
        _arctan_kernel,
        out_shape=jax.ShapeDtypeStruct((rows, lanes), dtype),
        grid=grid,
        in_specs=[pl.BlockSpec((row_tile, lanes), lambda i: (i, 0))],
        out_specs=pl.BlockSpec((row_tile, lanes), lambda i: (i, 0)),
        compiler_params=pltpu.CompilerParams(
            dimension_semantics=("parallel",)),
    )(x2d)

    out = out2d.reshape(padded_total)
    if needs_pad:
        out = out[:total]
    return out.reshape(orig_shape)


if __name__ == "__main__":
    key = jax.random.PRNGKey(0)
    # Small NCHW input; scaled so all three range-reduction regions are hit.
    x = jax.random.normal(key, (2, 4, 16, 16), dtype=jnp.float32) * 3.0

    y = arctan_pallas(x)
    jax.block_until_ready(y)

    # Cross-check against plain-JAX reference.
    y_ref = jnp.arctan(x)
    assert y.shape == x.shape and y.dtype == x.dtype
    assert jnp.allclose(y, y_ref, rtol=1e-5, atol=1e-5), "mismatch vs reference arctan"

    print("KERNEL_OK")
</pallas_src>

<mosaic_0001>
module attributes {stable_mosaic.version = 11 : i64} {
  func.func @_arctan_kernel(%arg0: i32, %arg1: memref<8x256xf32, #tpu.memory_space<vmem>>, %arg2: memref<8x256xf32, #tpu.memory_space<vmem>>) attributes {dimension_semantics = [#tpu.dimension_semantics<parallel>], iteration_bounds = array<i64: 1>, scalar_prefetch = 0 : i64, scratch_operands = 0 : i64, tpu.core_type = #tpu.core_type<tc>, window_params = [{transform_indices = @transform_0, window_bounds = array<i64: 8, 256>}, {transform_indices = @transform_1, window_bounds = array<i64: 8, 256>}]} {
    %c0 = arith.constant 0 : index
    %c0_0 = arith.constant 0 : index
    %0 = vector.load %arg1[%c0, %c0_0] : memref<8x256xf32, #tpu.memory_space<vmem>>, vector<8x256xf32>
    %1 = math.absf %0 : vector<8x256xf32>
    %cst = arith.constant 2.41421366 : f32
    %2 = vector.broadcast %cst : f32 to vector<8x256xf32>
    %3 = arith.cmpf ogt, %1, %2 : vector<8x256xf32>
    %cst_1 = arith.constant 0.414213568 : f32
    %4 = vector.broadcast %cst_1 : f32 to vector<8x256xf32>
    %5 = arith.cmpf ogt, %1, %4 : vector<8x256xf32>
    %cst_2 = arith.constant 1.000000e+00 : f32
    %6 = vector.broadcast %cst_2 : f32 to vector<8x256xf32>
    %7 = arith.subf %1, %6 : vector<8x256xf32>
    %8 = arith.select %5, %7, %1 : vector<8x256xi1>, vector<8x256xf32>
    %cst_3 = arith.constant -1.000000e+00 : f32
    %9 = vector.broadcast %cst_3 : f32 to vector<8x256xf32>
    %10 = arith.select %3, %9, %8 : vector<8x256xi1>, vector<8x256xf32>
    %cst_4 = arith.constant 1.000000e+30 : f32
    %11 = vector.broadcast %cst_4 : f32 to vector<8x256xf32>
    %12 = arith.minimumf %1, %11 : vector<8x256xf32>
    %cst_5 = arith.constant 1.000000e+00 : f32
    %13 = vector.broadcast %cst_5 : f32 to vector<8x256xf32>
    %14 = arith.addf %1, %13 : vector<8x256xf32>
    %cst_6 = arith.constant 1.000000e+00 : f32
    %15 = vector.broadcast %cst_6 : f32 to vector<8x256xf32>
    %16 = arith.select %5, %14, %15 : vector<8x256xi1>, vector<8x256xf32>
    %17 = arith.select %3, %12, %16 : vector<8x256xi1>, vector<8x256xf32>
    %cst_7 = arith.constant 0.785398185 : f32
    %cst_8 = arith.constant 0.000000e+00 : f32
    %18 = vector.broadcast %cst_7 : f32 to vector<8x256xf32>
    %19 = vector.broadcast %cst_8 : f32 to vector<8x256xf32>
    %20 = arith.select %5, %18, %19 : vector<8x256xi1>, vector<8x256xf32>
    %cst_9 = arith.constant 1.57079637 : f32
    %21 = vector.broadcast %cst_9 : f32 to vector<8x256xf32>
    %22 = arith.select %3, %21, %20 : vector<8x256xi1>, vector<8x256xf32>
    %23 = tpu.reciprocal %17 {approx = true} : vector<8x256xf32> -> vector<8x256xf32>
    %24 = arith.mulf %17, %23 : vector<8x256xf32>
    %cst_10 = arith.constant 2.000000e+00 : f32
    %25 = vector.broadcast %cst_10 : f32 to vector<8x256xf32>
    %26 = arith.subf %25, %24 : vector<8x256xf32>
    %27 = arith.mulf %23, %26 : vector<8x256xf32>
    %28 = arith.mulf %10, %27 : vector<8x256xf32>
    %29 = arith.mulf %28, %28 : vector<8x256xf32>
    %cst_11 = arith.constant 0.0805374458 : f32
    %30 = vector.broadcast %cst_11 : f32 to vector<8x256xf32>
    %31 = arith.mulf %30, %29 : vector<8x256xf32>
    %cst_12 = arith.constant 0.138776854 : f32
    %32 = vector.broadcast %cst_12 : f32 to vector<8x256xf32>
    %33 = arith.subf %31, %32 : vector<8x256xf32>
    %34 = arith.mulf %33, %29 : vector<8x256xf32>
    %cst_13 = arith.constant 0.199777111 : f32
    %35 = vector.broadcast %cst_13 : f32 to vector<8x256xf32>
    %36 = arith.addf %34, %35 : vector<8x256xf32>
    %37 = arith.mulf %36, %29 : vector<8x256xf32>
    %cst_14 = arith.constant 0.333329499 : f32
    %38 = vector.broadcast %cst_14 : f32 to vector<8x256xf32>
    %39 = arith.subf %37, %38 : vector<8x256xf32>
    %40 = arith.mulf %29, %39 : vector<8x256xf32>
    %cst_15 = arith.constant 1.000000e+00 : f32
    %41 = vector.broadcast %cst_15 : f32 to vector<8x256xf32>
    %42 = arith.addf %41, %40 : vector<8x256xf32>
    %43 = arith.mulf %28, %42 : vector<8x256xf32>
    %44 = arith.addf %22, %43 : vector<8x256xf32>
    %45 = tpu.bitcast %0 : vector<8x256xf32> -> vector<8x256xi32>
    %c-2147483648_i32 = arith.constant -2147483648 : i32
    %46 = vector.broadcast %c-2147483648_i32 : i32 to vector<8x256xi32>
    %47 = arith.andi %45, %46 : vector<8x256xi32>
    %48 = tpu.bitcast %44 : vector<8x256xf32> -> vector<8x256xi32>
    %49 = arith.ori %48, %47 : vector<8x256xi32>
    %50 = tpu.bitcast %49 : vector<8x256xi32> -> vector<8x256xf32>
    %c0_16 = arith.constant 0 : index
    %c0_17 = arith.constant 0 : index
    %51 = vector.load %arg2[%c0_16, %c0_17] : memref<8x256xf32, #tpu.memory_space<vmem>>, vector<8x256xf32>
    tpu.vector_store %arg2[%c0_16, %c0_17], %50 {strides = array<i32>} : memref<8x256xf32, #tpu.memory_space<vmem>>, vector<8x256xf32>,
    return
  }
  func.func @transform_0(%arg0: i32) -> (i32, i32) {
    %c0_i32 = arith.constant 0 : i32
    %c0_i32_0 = arith.constant 0 : i32
    return %arg0, %c0_i32 : i32, i32
  }
  func.func @transform_1(%arg0: i32) -> (i32, i32) {
    %c0_i32 = arith.constant 0 : i32
    %c0_i32_0 = arith.constant 0 : i32
    return %arg0, %c0_i32 : i32, i32
  }
}

</mosaic_0001>

<llo_original>
// kernel: tpu_custom_call.1
$region0: #{tpu_custom_call.1}
  #allocation0 [shape = 'u32[]', space=smem, size = 0x4, offset = 0x4, fixed_abs, tag = 'smem constant byte address 0x4 - core index']
  #allocation1 [shape = 'u32[144,128]{1,0:T(1,128)}', space=vmem, size = 0x12000, scoped, tag = 'internal scratch']
  %s0 = inlined_call_operand.hbm [shape: f32[8,256], index: 0, kind: input, shape index: {}]
  %s1 = inlined_call_operand.hbm [shape: f32[8,256], index: 1, kind: output, shape index: {}]
  %s2 = sld [smem:[#allocation0]]
  $region18: #{tpu_custom_call.1} parent=0
    _
  %s4 = ssub.s32 1, %s2
  %s5 = scalar_select 0, %s4, %s2
  $region1: #{tpu_custom_call.1} parent=0
    #allocation2 [shape = 'u8[8192]{0}', space=vmem, size = 0x2000, scoped, tag = 'input window, operand 0, single buffered']
    #allocation3 [shape = 's32[1]{0}', space=sflag, size = 0x4, scoped, tag = 'scoped memory for tpu_custom_call.1']
    #allocation4 [shape = 's32[1]{0}', space=sflag, size = 0x4, scoped, tag = 'scoped memory for tpu_custom_call.1']
    #allocation5 [shape = 'u8[8192]{0}', space=vmem, size = 0x2000, scoped, tag = 'output window, operand 0, single buffered']
    %6 = vsyncpa [#allocation3], 0
    %7 = vsyncpa [#allocation4], 0
    // Predicated region
    $region2: #{tpu_custom_call.1} parent=1 // pred_check
      _
    $region3: #{tpu_custom_call.1} parent=1 // pred_check_branch
      %9 = sbr.rel (0) target = $region5
    $region4: #{tpu_custom_call.1} parent=1 // pred_region
      %s11 = ssub.s32 256, 256
      %12 = vsyncadd [#allocation3], %s11
      %s14 = sshll.u32 [#allocation2], 4
      %s15 = int_to_ptr.vmem [resolvable:$true] %s14
      %17 = dma.hbm_to_vmem [thread:$0]  %s0, 256, %s15, [#allocation3]
    $region5: #{tpu_custom_call.1} parent=1 // pred_fallthru
      _
    // Predicated region
    $region6: #{tpu_custom_call.1} parent=1 // pred_check
      _
    $region7: #{tpu_custom_call.1} parent=1 // pred_check_branch
      %19 = sbr.rel (0) target = $region9
    $region8: #{tpu_custom_call.1} parent=1 // pred_region
      %20 = dma.done [#allocation3], 256
    $region9: #{tpu_custom_call.1} parent=1 // pred_fallthru
      _
    %v21 = vld [vmem:[#allocation2] sm:$0xff]
    %v22 = vld [vmem:[#allocation2 + $0x8] sm:$0xff]
    %v23 = vand.u32 2147483647, %v21
    %v24 = vand.u32 2147483647, %v22
    %vm25 = vcmp.gt.f32.partialorder %v23, 2.4142137
    %vm26 = vcmp.gt.f32.partialorder %v24, 2.4142137
    %vm27 = vcmp.gt.f32.partialorder %v23, 0.41421357
    %vm28 = vcmp.gt.f32.partialorder %v24, 0.41421357
    %v29 = vsub.f32 %v23, 1.0
    %v30 = vsub.f32 %v24, 1.0
    %v31 = vsel %vm27, %v29, %v23
    %v32 = vsel %vm28, %v30, %v24
    %v33 = vsel %vm25, -1.0, %v31
    %v34 = vsel %vm26, -1.0, %v32
    %v35 = vmin.f32 %v23, 1e+30
    %v36 = vmin.f32 %v24, 1e+30
    %v37 = vadd.f32 %v23, 1.0
    %v38 = vadd.f32 %v24, 1.0
    %v39 = vsel %vm27, %v37, 1.0
    %v40 = vsel %vm28, %v38, 1.0
    %v41 = vsel %vm25, %v35, %v39
    %v42 = vsel %vm26, %v36, %v40
    %v43 = vsel %vm27, 0.7853982, 0.0
    %v44 = vsel %vm28, 0.7853982, 0.0
    %v45 = vsel %vm25, 1.5707964, %v43
    %v46 = vsel %vm26, 1.5707964, %v44
    %v47 = vrcp.pop %v41
    %v48 = vrcp.pop %v42
    %v49 = vmul.f32 %v41, %v47
    %v50 = vmul.f32 %v42, %v48
    %v51 = vsub.f32 2.0, %v49
    %v52 = vsub.f32 2.0, %v50
    %v53 = vmul.f32 %v47, %v51
    %v54 = vmul.f32 %v48, %v52
    %v55 = vmul.f32 %v33, %v53
    %v56 = vmul.f32 %v34, %v54
    %v57 = vmul.f32 %v55, %v55
    %v58 = vmul.f32 %v56, %v56
    %v59 = vmul.f32 %v57, 0.080537446
    %v60 = vmul.f32 %v58, 0.080537446
    %v61 = vsub.f32 %v59, 0.13877685
    %v62 = vsub.f32 %v60, 0.13877685
    %v63 = vmul.f32 %v61, %v57
    %v64 = vmul.f32 %v62, %v58
    %v65 = vadd.f32 %v63, 0.19977711
    %v66 = vadd.f32 %v64, 0.19977711
    %v67 = vmul.f32 %v65, %v57
    %v68 = vmul.f32 %v66, %v58
    %v69 = vsub.f32 %v67, 0.3333295
    %v70 = vsub.f32 %v68, 0.3333295
    %v71 = vmul.f32 %v57, %v69
    %v72 = vmul.f32 %v58, %v70
    %v73 = vadd.f32 %v71, 1.0
    %v74 = vadd.f32 %v72, 1.0
    %v75 = vmul.f32 %v55, %v73
    %v76 = vmul.f32 %v56, %v74
    %v77 = vadd.f32 %v45, %v75
    %v78 = vadd.f32 %v46, %v76
    %v81 = vand.u32 %v21, 2147483648
    %v82 = vand.u32 %v22, 2147483648
    %v85 = vor.u32 %v77, %v81
    %v86 = vor.u32 %v78, %v82
    %89 = vst [vmem:[#allocation5] sm:$0xff] %v85
    %90 = vst [vmem:[#allocation5 + $0x8] sm:$0xff] %v86
    // Predicated region
    $region10: #{tpu_custom_call.1} parent=1 // pred_check
      _
    $region11: #{tpu_custom_call.1} parent=1 // pred_check_branch
      %92 = sbr.rel (0) target = $region13
    $region12: #{tpu_custom_call.1} parent=1 // pred_region
      %s94 = ssub.s32 256, 256
      %95 = vsyncadd [#allocation4], %s94
      %s97 = sshll.u32 [#allocation5], 4
      %s98 = int_to_ptr.vmem [resolvable:$true] %s97
      %100 = dma.vmem_to_hbm [thread:$0]  %s98, 256, %s1, [#allocation4]
    $region13: #{tpu_custom_call.1} parent=1 // pred_fallthru
      _
    // Predicated region
    $region14: #{tpu_custom_call.1} parent=1 // pred_check
      _
    $region15: #{tpu_custom_call.1} parent=1 // pred_check_branch
      %102 = sbr.rel (0) target = $region17
    $region16: #{tpu_custom_call.1} parent=1 // pred_region
      %103 = dma.done [#allocation4], 256
    $region17: #{tpu_custom_call.1} parent=1 // pred_fallthru
      _
    %104 = vsyncpa [#allocation3], 1
    %105 = vsyncpa [#allocation4], 1

</llo_original>
